<compile_context>
chip_gen: v5e
topology: v5e:2x2
jax: 0.10.0
libtpu: 0.0.40
codegen_flags: <defaults>
</compile_context>

<pallas_src>
import functools

import jax
import jax.numpy as jnp
from jax.experimental import pallas as pl
from jax.experimental.pallas import tpu as pltpu


LANE = 128          # lane width (last dim)
BATCH_ALIGN = 16    # bf16 sublane packing -> batch tile multiple of 16


def _round_up(x, m):
    return ((x + m - 1) // m) * m


def _mish_f32(h):
    # Mish(x) = x * tanh(softplus(x)); numerically-stable softplus, all in f32.
    sp = jnp.where(h > 20.0, h, jnp.log1p(jnp.exp(jnp.minimum(h, 20.0))))
    return h * jnp.tanh(sp)


def mlp_kernel(x_ref, w1_ref, b1_ref, w2_ref, b2_ref, w3_ref, b3_ref, o_ref):
    # x_ref / w*_ref are bf16, b*_ref are f32, accumulation is f32 on the MXU.
    x = x_ref[...]
    # Linear(input_dim -> hidden_dim)   (no activation after it, per module)
    h = jnp.dot(x, w1_ref[...], preferred_element_type=jnp.float32) + b1_ref[...]
    # Linear(hidden_dim -> hidden_dim)
    h = jnp.dot(h.astype(jnp.bfloat16), w2_ref[...],
                preferred_element_type=jnp.float32) + b2_ref[...]
    # Mish() -- EUP transcendentals, f32 elementwise
    h = _mish_f32(h)
    # Linear(hidden_dim -> output_dim)
    o_ref[...] = jnp.dot(h.astype(jnp.bfloat16), w3_ref[...],
                         preferred_element_type=jnp.float32) + b3_ref[...]


def _pick_batch_tile(B):
    """Multiple of 16 rows; >= 2 grid steps when the batch allows (v7x megacore)."""
    Bp = _round_up(max(B, 1), BATCH_ALIGN)
    tb = min(256, Bp)
    if Bp // tb < 2 and Bp >= 2 * BATCH_ALIGN:
        tb = _round_up(Bp // 2, BATCH_ALIGN)
    return tb


@functools.partial(jax.jit, static_argnames=("batch_tile",))
def mlp_forward(x, params, *, batch_tile=None):
    """Whole MLP in one Pallas kernel, tiled over the batch dimension.

    params: f32 tuple (w1, b1, w2, b2, w3, b3) with w stored as (in, out), b as (1, out).
    Padding + bf16 casts happen here; in production, pre-pad/cast the weights once
    outside the step function.
    """
    w1, b1, w2, b2, w3, b3 = params
    B, D = x.shape
    H = w1.shape[1]
    O = w3.shape[1]

    Dp = _round_up(D, LANE)
    Hp = _round_up(H, LANE)
    Op = _round_up(O, LANE)

    tb = batch_tile if batch_tile is not None else _pick_batch_tile(B)
    grid_b = pl.cdiv(B, tb)
    Bp = grid_b * tb

    def pad2(a, rows, cols):
        return jnp.pad(a, ((0, rows - a.shape[0]), (0, cols - a.shape[1])))

    # Zero padding keeps the math exact: padded feature columns stay 0 through
    # every layer (Mish(0) == 0) and padded batch rows are sliced off at the end.
    x_p = pad2(x.astype(jnp.float32), Bp, Dp).astype(jnp.bfloat16)
    w1_p = pad2(w1, Dp, Hp).astype(jnp.bfloat16)
    w2_p = pad2(w2, Hp, Hp).astype(jnp.bfloat16)
    w3_p = pad2(w3, Hp, Op).astype(jnp.bfloat16)
    b1_p = pad2(b1, 1, Hp).astype(jnp.float32)
    b2_p = pad2(b2, 1, Hp).astype(jnp.float32)
    b3_p = pad2(b3, 1, Op).astype(jnp.float32)

    # VMEM budget: double-buffered x (bf16) / out (f32) tiles, resident bf16 weights
    # (double-buffered allocation by default), f32 biases, f32 intermediates.
    est = (
        2 * tb * Dp * 2            # x tiles (bf16, 2 buffers)
        + 2 * tb * Op * 4          # out tiles (f32, 2 buffers)
        + 2 * (Dp * Hp + Hp * Hp + Hp * Op) * 2   # weights (bf16, 2 buffers)
        + 2 * (2 * Hp + Op) * 4    # biases (f32, 2 buffers)
        + 4 * tb * Hp * 4          # in-kernel f32 intermediates (rough)
    )
    vmem_limit = int(min(64 * 2**20, max(2 * est, 32 * 2**20)))

    full = lambda shape: pl.BlockSpec(shape, lambda i: (0, 0))

    out_p = pl.pallas_call(
        mlp_kernel,
        out_shape=jax.ShapeDtypeStruct((Bp, Op), jnp.float32),
        grid=(grid_b,),
        in_specs=[
            pl.BlockSpec((tb, Dp), lambda i: (i, 0)),  # x tile
            full((Dp, Hp)),                            # W1 (resident)
            full((1, Hp)),                             # b1
            full((Hp, Hp)),                            # W2 (resident)
            full((1, Hp)),                             # b2
            full((Hp, Op)),                            # W3 (resident)
            full((1, Op)),                             # b3
        ],
        out_specs=pl.BlockSpec((tb, Op), lambda i: (i, 0)),
        compiler_params=pltpu.CompilerParams(
            dimension_semantics=("parallel",),
            vmem_limit_bytes=vmem_limit,
        ),
    )(x_p, w1_p, b1_p, w2_p, b2_p, w3_p, b3_p)

    return out_p[:B, :O]


def init_params(key, input_dim, hidden_dim, output_dim):
    """Deterministic init mimicking torch.nn.Linear (U(-1/sqrt(fan_in), +))."""
    def linear(key, fan_in, fan_out):
        kw, kb = jax.random.split(key)
        bound = 1.0 / jnp.sqrt(fan_in)
        # stored as (in, out) so the kernel does x @ W
        w = jax.random.uniform(kw, (fan_in, fan_out), jnp.float32, -bound, bound)
        b = jax.random.uniform(kb, (1, fan_out), jnp.float32, -bound, bound)
        return w, b

    k1, k2, k3 = jax.random.split(key, 3)
    w1, b1 = linear(k1, input_dim, hidden_dim)
    w2, b2 = linear(k2, hidden_dim, hidden_dim)
    w3, b3 = linear(k3, hidden_dim, output_dim)
    return (w1, b1, w2, b2, w3, b3)


def reference_forward(x, params):
    """Pure-JAX f32 reference matching the PyTorch forward exactly."""
    w1, b1, w2, b2, w3, b3 = params
    h = x @ w1 + b1
    h = h @ w2 + b2
    h = _mish_f32(h)
    return h @ w3 + b3


if __name__ == "__main__":
    # Small shapes consistent with the module; batch=32 gives a 2-step grid so the
    # batch-tiling / pipelining path is actually exercised.
    batch, input_dim, hidden_dim, output_dim = 32, 16, 32, 4

    key = jax.random.PRNGKey(0)
    kx, kp = jax.random.split(key)
    x = jax.random.normal(kx, (batch, input_dim), jnp.float32)
    params = init_params(kp, input_dim, hidden_dim, output_dim)

    out = mlp_forward(x, params)
    out = jax.block_until_ready(out)

    ref = reference_forward(x, params)
    assert out.shape == (batch, output_dim)
    max_err = float(jnp.max(jnp.abs(out - ref)))
    # bf16 matmul operands with f32 accumulation -> ~1e-2 tolerance vs f32 reference.
    assert jnp.allclose(out, ref, atol=2e-2, rtol=2e-2), (
        f"mismatch vs reference, max abs err={max_err}"
    )

    print("KERNEL_OK")
</pallas_src>

<mosaic_0001>
module attributes {stable_mosaic.version = 11 : i64} {
  func.func @mlp_kernel(%arg0: i32, %arg1: memref<16x128xbf16, #tpu.memory_space<vmem>>, %arg2: memref<128x128xbf16, #tpu.memory_space<vmem>>, %arg3: memref<1x128xf32, #tpu.memory_space<vmem>>, %arg4: memref<128x128xbf16, #tpu.memory_space<vmem>>, %arg5: memref<1x128xf32, #tpu.memory_space<vmem>>, %arg6: memref<128x128xbf16, #tpu.memory_space<vmem>>, %arg7: memref<1x128xf32, #tpu.memory_space<vmem>>, %arg8: memref<16x128xf32, #tpu.memory_space<vmem>>) attributes {dimension_semantics = [#tpu.dimension_semantics<parallel>], iteration_bounds = array<i64: 2>, scalar_prefetch = 0 : i64, scratch_operands = 0 : i64, tpu.core_type = #tpu.core_type<tc>, window_params = [{transform_indices = @transform_0, window_bounds = array<i64: 16, 128>}, {pipeline_mode = #tpu.pipeline_mode<synchronous>, transform_indices = @transform_1, window_bounds = array<i64: 128, 128>}, {pipeline_mode = #tpu.pipeline_mode<synchronous>, transform_indices = @transform_2, window_bounds = array<i64: 1, 128>}, {pipeline_mode = #tpu.pipeline_mode<synchronous>, transform_indices = @transform_3, window_bounds = array<i64: 128, 128>}, {pipeline_mode = #tpu.pipeline_mode<synchronous>, transform_indices = @transform_4, window_bounds = array<i64: 1, 128>}, {pipeline_mode = #tpu.pipeline_mode<synchronous>, transform_indices = @transform_5, window_bounds = array<i64: 128, 128>}, {pipeline_mode = #tpu.pipeline_mode<synchronous>, transform_indices = @transform_6, window_bounds = array<i64: 1, 128>}, {transform_indices = @transform_7, window_bounds = array<i64: 16, 128>}]} {
    %c0 = arith.constant 0 : index
    %c0_0 = arith.constant 0 : index
    %0 = vector.load %arg1[%c0, %c0_0] : memref<16x128xbf16, #tpu.memory_space<vmem>>, vector<16x128xbf16>
    %c0_1 = arith.constant 0 : index
    %c0_2 = arith.constant 0 : index
    %1 = vector.load %arg2[%c0_1, %c0_2] : memref<128x128xbf16, #tpu.memory_space<vmem>>, vector<128x128xbf16>
    %cst = arith.constant dense<0.000000e+00> : vector<16x128xf32>
    %2 = tpu.matmul %0, %1, %cst {dimension_numbers = #tpu.dot_dimension_numbers<[1], [0], [0], [1], [0, 0, 1, 1], [], []>} : vector<16x128xbf16>, vector<128x128xbf16>, vector<16x128xf32> -> vector<16x128xf32>
    %c0_3 = arith.constant 0 : index
    %c0_4 = arith.constant 0 : index
    %3 = vector.load %arg3[%c0_3, %c0_4] : memref<1x128xf32, #tpu.memory_space<vmem>>, vector<1x128xf32>
    %4 = vector.broadcast %3 : vector<1x128xf32> to vector<16x128xf32>
    %5 = arith.addf %2, %4 : vector<16x128xf32>
    %6 = arith.truncf %5 : vector<16x128xf32> to vector<16x128xbf16>
    %c0_5 = arith.constant 0 : index
    %c0_6 = arith.constant 0 : index
    %7 = vector.load %arg4[%c0_5, %c0_6] : memref<128x128xbf16, #tpu.memory_space<vmem>>, vector<128x128xbf16>
    %cst_7 = arith.constant dense<0.000000e+00> : vector<16x128xf32>
    %8 = tpu.matmul %6, %7, %cst_7 {dimension_numbers = #tpu.dot_dimension_numbers<[1], [0], [0], [1], [0, 0, 1, 1], [], []>} : vector<16x128xbf16>, vector<128x128xbf16>, vector<16x128xf32> -> vector<16x128xf32>
    %c0_8 = arith.constant 0 : index
    %c0_9 = arith.constant 0 : index
    %9 = vector.load %arg5[%c0_8, %c0_9] : memref<1x128xf32, #tpu.memory_space<vmem>>, vector<1x128xf32>
    %10 = vector.broadcast %9 : vector<1x128xf32> to vector<16x128xf32>
    %11 = arith.addf %8, %10 : vector<16x128xf32>
    %cst_10 = arith.constant 2.000000e+01 : f32
    %12 = vector.broadcast %cst_10 : f32 to vector<16x128xf32>
    %13 = arith.cmpf ogt, %11, %12 : vector<16x128xf32>
    %cst_11 = arith.constant 2.000000e+01 : f32
    %14 = vector.broadcast %cst_11 : f32 to vector<16x128xf32>
    %15 = arith.minimumf %11, %14 : vector<16x128xf32>
    %16 = math.exp %15 : vector<16x128xf32>
    %17 = math.log1p %16 : vector<16x128xf32>
    %18 = arith.select %13, %11, %17 : vector<16x128xi1>, vector<16x128xf32>
    %19 = math.tanh %18 : vector<16x128xf32>
    %20 = arith.mulf %11, %19 : vector<16x128xf32>
    %21 = arith.truncf %20 : vector<16x128xf32> to vector<16x128xbf16>
    %c0_12 = arith.constant 0 : index
    %c0_13 = arith.constant 0 : index
    %22 = vector.load %arg6[%c0_12, %c0_13] : memref<128x128xbf16, #tpu.memory_space<vmem>>, vector<128x128xbf16>
    %cst_14 = arith.constant dense<0.000000e+00> : vector<16x128xf32>
    %23 = tpu.matmul %21, %22, %cst_14 {dimension_numbers = #tpu.dot_dimension_numbers<[1], [0], [0], [1], [0, 0, 1, 1], [], []>} : vector<16x128xbf16>, vector<128x128xbf16>, vector<16x128xf32> -> vector<16x128xf32>
    %c0_15 = arith.constant 0 : index
    %c0_16 = arith.constant 0 : index
    %24 = vector.load %arg7[%c0_15, %c0_16] : memref<1x128xf32, #tpu.memory_space<vmem>>, vector<1x128xf32>
    %25 = vector.broadcast %24 : vector<1x128xf32> to vector<16x128xf32>
    %26 = arith.addf %23, %25 : vector<16x128xf32>
    %c0_17 = arith.constant 0 : index
    %c0_18 = arith.constant 0 : index
    %27 = vector.load %arg8[%c0_17, %c0_18] : memref<16x128xf32, #tpu.memory_space<vmem>>, vector<16x128xf32>
    tpu.vector_store %arg8[%c0_17, %c0_18], %26 {strides = array<i32>} : memref<16x128xf32, #tpu.memory_space<vmem>>, vector<16x128xf32>,
    return
  }
  func.func @transform_0(%arg0: i32) -> (i32, i32) {
    %c0_i32 = arith.constant 0 : i32
    %c0_i32_0 = arith.constant 0 : i32
    return %arg0, %c0_i32 : i32, i32
  }
  func.func @transform_1(%arg0: i32) -> (i32, i32) {
    %c0_i32 = arith.constant 0 : i32
    %c0_i32_0 = arith.constant 0 : i32
    %c0_i32_1 = arith.constant 0 : i32
    return %c0_i32, %c0_i32_0 : i32, i32
  }
  func.func @transform_2(%arg0: i32) -> (i32, i32) {
    %c0_i32 = arith.constant 0 : i32
    %c0_i32_0 = arith.constant 0 : i32
    %c0_i32_1 = arith.constant 0 : i32
    return %c0_i32, %c0_i32_0 : i32, i32
  }
  func.func @transform_3(%arg0: i32) -> (i32, i32) {
    %c0_i32 = arith.constant 0 : i32
    %c0_i32_0 = arith.constant 0 : i32
    %c0_i32_1 = arith.constant 0 : i32
    return %c0_i32, %c0_i32_0 : i32, i32
  }
  func.func @transform_4(%arg0: i32) -> (i32, i32) {
    %c0_i32 = arith.constant 0 : i32
    %c0_i32_0 = arith.constant 0 : i32
    %c0_i32_1 = arith.constant 0 : i32
    return %c0_i32, %c0_i32_0 : i32, i32
  }
  func.func @transform_5(%arg0: i32) -> (i32, i32) {
    %c0_i32 = arith.constant 0 : i32
    %c0_i32_0 = arith.constant 0 : i32
    %c0_i32_1 = arith.constant 0 : i32
    return %c0_i32, %c0_i32_0 : i32, i32
  }
  func.func @transform_6(%arg0: i32) -> (i32, i32) {
    %c0_i32 = arith.constant 0 : i32
    %c0_i32_0 = arith.constant 0 : i32
    %c0_i32_1 = arith.constant 0 : i32
    return %c0_i32, %c0_i32_0 : i32, i32
  }
  func.func @transform_7(%arg0: i32) -> (i32, i32) {
    %c0_i32 = arith.constant 0 : i32
    %c0_i32_0 = arith.constant 0 : i32
    return %arg0, %c0_i32 : i32, i32
  }
}

</mosaic_0001>

<llo_original>
// kernel: mlp_forward.1
$region0: #{mlp_forward.1}
  #allocation0 [shape = 'u32[]', space=smem, size = 0x4, offset = 0x4, fixed_abs, tag = 'smem constant byte address 0x4 - core index']
  #allocation1 [shape = 'u32[72,128]{1,0:T(1,128)}', space=vmem, size = 0x9000, scoped, tag = 'internal scratch']
  %s0 = inlined_call_operand.vmem [shape: bf16[32,128], index: 0, kind: input, shape index: {}]
  %s1 = inlined_call_operand.vmem [shape: bf16[128,128], index: 1, kind: input, shape index: {}]
  %s2 = inlined_call_operand.vmem [shape: f32[1,128], index: 2, kind: input, shape index: {}]
  %s3 = inlined_call_operand.vmem [shape: bf16[128,128], index: 3, kind: input, shape index: {}]
  %s4 = inlined_call_operand.vmem [shape: f32[1,128], index: 4, kind: input, shape index: {}]
  %s5 = inlined_call_operand.vmem [shape: bf16[128,128], index: 5, kind: input, shape index: {}]
  %s6 = inlined_call_operand.vmem [shape: f32[1,128], index: 6, kind: input, shape index: {}]
  %s7 = inlined_call_operand.vmem [shape: f32[32,128], index: 7, kind: output, shape index: {}]
  %s8 = sld [smem:[#allocation0]]
  $region61: #{mlp_forward.1} parent=0
    _
  %s10 = ssub.s32 1, %s8
  %s11 = scalar_select 0, %s10, %s8
  loop: start=0, step=1, limit=4
  $region2: #{mlp_forward.1} parent=0 // loop_pre_header
    _
  $region3: #{mlp_forward.1} parent=0 // loop_header
    %s13 = sphi 0, %s17
    %p14 = scmp.ge.s32.totalorder %s13, 4
    %s23 = sphi 0, %s25
    %s26 = sphi 0, %s23
    %s27 = sphi 0, %s26
    %s43 = sphi 0, %s27
    %s47 = sphi 0, %s47
    %s49 = sphi 0, %s47
    %s50 = sphi 0, %s49
    %s64 = sphi 0, %s50
    %s68 = sphi 0, %s68
    %s70 = sphi 0, %s68
    %s71 = sphi 0, %s70
    %s85 = sphi 0, %s71
    %s89 = sphi 0, %s89
    %s91 = sphi 0, %s89
    %s92 = sphi 0, %s91
    %s106 = sphi 0, %s92
    %s110 = sphi 0, %s110
    %s112 = sphi 0, %s110
    %s113 = sphi 0, %s112
    %s127 = sphi 0, %s113
    %s131 = sphi 0, %s131
    %s133 = sphi 0, %s131
    %s134 = sphi 0, %s133
    %s148 = sphi 0, %s134
    %s152 = sphi 0, %s152
    %s154 = sphi 0, %s152
    %s155 = sphi 0, %s154
    %s169 = sphi 0, %s155
    %s175 = sphi 0, %s177
    %s178 = sphi 0, %s175
    %s179 = sphi 0, %s178
    %s195 = sphi 0, %s179
  $region4: #{mlp_forward.1} parent=0 // loop_header_branch
    %16 = sbr.rel (%p14) target = $region8
  $region5: #{mlp_forward.1} parent=0 // loop_body
    %s18 = ssub.s32 %s13, 1
    %s19 = ssub.s32 %s13, 2
    %s20 = sadd.s32 %s13, 1
    %s21 = ssub.s32 %s13, %s20
    %p22 = scmp.eq.s32.totalorder %s21, 0
    %s24 = sadd.s32 %s23, 1
    %s25 = scalar_select %p22, %s23, %s24
    %p28 = pneg %p22
    %p29 = scmp.eq.s32.totalorder %s13, 1
    %p30 = por %p28, %p29
    %p31 = scmp.ne.s32.totalorder %s23, %s26
    %p32 = scmp.eq.s32.totalorder %s13, 0
    %p33 = por %p31, %p32
    %p34 = scmp.ne.s32.totalorder %s23, %s26
    %p35 = scmp.eq.s32.totalorder %s18, 1
    %p36 = por %p34, %p35
    %p37 = scmp.ne.s32.totalorder %s26, %s27
    %p38 = scmp.eq.s32.totalorder %s18, 0
    %p39 = por %p37, %p38
    %p40 = scmp.ne.s32.totalorder %s26, %s27
    %p41 = scmp.eq.s32.totalorder %s19, 1
    %p42 = por %p40, %p41
    %p44 = scmp.ne.s32.totalorder %s27, %s43
    %p45 = scmp.eq.s32.totalorder %s19, 0
    %p46 = por %p44, %p45
    %s48 = sadd.s32 %s47, 1
    %p51 = scmp.eq.s32.totalorder %s13, 1
    %p52 = scmp.ne.s32.totalorder %s47, %s49
    %p53 = scmp.eq.s32.totalorder %s13, 0
    %p54 = por %p52, %p53
    %p55 = scmp.ne.s32.totalorder %s47, %s49
    %p56 = scmp.eq.s32.totalorder %s18, 1
    %p57 = por %p55, %p56
    %p58 = scmp.ne.s32.totalorder %s49, %s50
    %p59 = scmp.eq.s32.totalorder %s18, 0
    %p60 = por %p58, %p59
    %p61 = scmp.ne.s32.totalorder %s49, %s50
    %p62 = scmp.eq.s32.totalorder %s19, 1
    %p63 = por %p61, %p62
    %p65 = scmp.ne.s32.totalorder %s50, %s64
    %p66 = scmp.eq.s32.totalorder %s19, 0
    %p67 = por %p65, %p66
    %s69 = sadd.s32 %s68, 1
    %p72 = scmp.eq.s32.totalorder %s13, 1
    %p73 = scmp.ne.s32.totalorder %s68, %s70
    %p74 = scmp.eq.s32.totalorder %s13, 0
    %p75 = por %p73, %p74
    %p76 = scmp.ne.s32.totalorder %s68, %s70
    %p77 = scmp.eq.s32.totalorder %s18, 1
    %p78 = por %p76, %p77
    %p79 = scmp.ne.s32.totalorder %s70, %s71
    %p80 = scmp.eq.s32.totalorder %s18, 0
    %p81 = por %p79, %p80
    %p82 = scmp.ne.s32.totalorder %s70, %s71
    %p83 = scmp.eq.s32.totalorder %s19, 1
    %p84 = por %p82, %p83
    %p86 = scmp.ne.s32.totalorder %s71, %s85
    %p87 = scmp.eq.s32.totalorder %s19, 0
    %p88 = por %p86, %p87
    %s90 = sadd.s32 %s89, 1
    %p93 = scmp.eq.s32.totalorder %s13, 1
    %p94 = scmp.ne.s32.totalorder %s89, %s91
    %p95 = scmp.eq.s32.totalorder %s13, 0
    %p96 = por %p94, %p95
    %p97 = scmp.ne.s32.totalorder %s89, %s91
    %p98 = scmp.eq.s32.totalorder %s18, 1
    %p99 = por %p97, %p98
    %p100 = scmp.ne.s32.totalorder %s91, %s92
    %p101 = scmp.eq.s32.totalorder %s18, 0
    %p102 = por %p100, %p101
    %p103 = scmp.ne.s32.totalorder %s91, %s92
    %p104 = scmp.eq.s32.totalorder %s19, 1
    %p105 = por %p103, %p104
    %p107 = scmp.ne.s32.totalorder %s92, %s106
    %p108 = scmp.eq.s32.totalorder %s19, 0
    %p109 = por %p107, %p108
    %s111 = sadd.s32 %s110, 1
    %p114 = scmp.eq.s32.totalorder %s13, 1
    %p115 = scmp.ne.s32.totalorder %s110, %s112
    %p116 = scmp.eq.s32.totalorder %s13, 0
    %p117 = por %p115, %p116
    %p118 = scmp.ne.s32.totalorder %s110, %s112
    %p119 = scmp.eq.s32.totalorder %s18, 1
    %p120 = por %p118, %p119
    %p121 = scmp.ne.s32.totalorder %s112, %s113
    %p122 = scmp.eq.s32.totalorder %s18, 0
    %p123 = por %p121, %p122
    %p124 = scmp.ne.s32.totalorder %s112, %s113
    %p125 = scmp.eq.s32.totalorder %s19, 1
    %p126 = por %p124, %p125
    %p128 = scmp.ne.s32.totalorder %s113, %s127
    %p129 = scmp.eq.s32.totalorder %s19, 0
    %p130 = por %p128, %p129
    %s132 = sadd.s32 %s131, 1
    %p135 = scmp.eq.s32.totalorder %s13, 1
    %p136 = scmp.ne.s32.totalorder %s131, %s133
    %p137 = scmp.eq.s32.totalorder %s13, 0
    %p138 = por %p136, %p137
    %p139 = scmp.ne.s32.totalorder %s131, %s133
    %p140 = scmp.eq.s32.totalorder %s18, 1
    %p141 = por %p139, %p140
    %p142 = scmp.ne.s32.totalorder %s133, %s134
    %p143 = scmp.eq.s32.totalorder %s18, 0
    %p144 = por %p142, %p143
    %p145 = scmp.ne.s32.totalorder %s133, %s134
    %p146 = scmp.eq.s32.totalorder %s19, 1
    %p147 = por %p145, %p146
    %p149 = scmp.ne.s32.totalorder %s134, %s148
    %p150 = scmp.eq.s32.totalorder %s19, 0
    %p151 = por %p149, %p150
    %s153 = sadd.s32 %s152, 1
    %p156 = scmp.eq.s32.totalorder %s13, 1
    %p157 = scmp.ne.s32.totalorder %s152, %s154
    %p158 = scmp.eq.s32.totalorder %s13, 0
    %p159 = por %p157, %p158
    %p160 = scmp.ne.s32.totalorder %s152, %s154
    %p161 = scmp.eq.s32.totalorder %s18, 1
    %p162 = por %p160, %p161
    %p163 = scmp.ne.s32.totalorder %s154, %s155
    %p164 = scmp.eq.s32.totalorder %s18, 0
    %p165 = por %p163, %p164
    %p166 = scmp.ne.s32.totalorder %s154, %s155
    %p167 = scmp.eq.s32.totalorder %s19, 1
    %p168 = por %p166, %p167
    %p170 = scmp.ne.s32.totalorder %s155, %s169
    %p171 = scmp.eq.s32.totalorder %s19, 0
    %p172 = por %p170, %p171
    %s173 = ssub.s32 %s13, %s20
    %p174 = scmp.eq.s32.totalorder %s173, 0
    %s176 = sadd.s32 %s175, 1
    %s177 = scalar_select %p174, %s175, %s176
    %p180 = pneg %p174
    %p181 = scmp.eq.s32.totalorder %s13, 1
    %p182 = por %p180, %p181
    %p183 = scmp.ne.s32.totalorder %s175, %s178
    %p184 = scmp.eq.s32.totalorder %s13, 0
    %p185 = por %p183, %p184
    %p186 = scmp.ne.s32.totalorder %s175, %s178
    %p187 = scmp.eq.s32.totalorder %s18, 1
    %p188 = por %p186, %p187
    %p189 = scmp.ne.s32.totalorder %s178, %s179
    %p190 = scmp.eq.s32.totalorder %s18, 0
    %p191 = por %p189, %p190
    %p192 = scmp.ne.s32.totalorder %s178, %s179
    %p193 = scmp.eq.s32.totalorder %s19, 1
    %p194 = por %p192, %p193
    %p196 = scmp.ne.s32.totalorder %s179, %s195
    %p197 = scmp.eq.s32.totalorder %s19, 0
    %p198 = por %p196, %p197
    %p199 = scmp.le.s32.totalorder 1, %s13
    %p200 = scmp.lt.s32.totalorder %s13, 3
    %p201 = pnand %p199, %p200
    %p202 = pneg %p201
    // Predicated region
    $region9: #{mlp_forward.1} parent=5 // pred_check
      _
    $region10: #{mlp_forward.1} parent=5 // pred_check_branch
      %204 = sbr.rel (%p201) target = $region12
    $region11: #{mlp_forward.1} parent=5 // pred_region
      %s205 = ssub.s32 %s13, 1
      // Predicated region
      $region13: #{mlp_forward.1} parent=11 // pred_check
        %p206 = pneg %p60
      $region14: #{mlp_forward.1} parent=11 // pred_check_branch
        %208 = sbr.rel (%p206) target = $region16
      $region15: #{mlp_forward.1} parent=11 // pred_region
        _
      $region16: #{mlp_forward.1} parent=11 // pred_fallthru
        _
      // Predicated region
      $region17: #{mlp_forward.1} parent=11 // pred_check
        %p209 = pneg %p81
      $region18: #{mlp_forward.1} parent=11 // pred_check_branch
        %211 = sbr.rel (%p209) target = $region20
      $region19: #{mlp_forward.1} parent=11 // pred_region
        _
      $region20: #{mlp_forward.1} parent=11 // pred_fallthru
        _
      // Predicated region
      $region21: #{mlp_forward.1} parent=11 // pred_check
        %p212 = pneg %p102
      $region22: #{mlp_forward.1} parent=11 // pred_check_branch
        %214 = sbr.rel (%p212) target = $region24
      $region23: #{mlp_forward.1} parent=11 // pred_region
        _
      $region24: #{mlp_forward.1} parent=11 // pred_fallthru
        _
      // Predicated region
      $region25: #{mlp_forward.1} parent=11 // pred_check
        %p215 = pneg %p123
      $region26: #{mlp_forward.1} parent=11 // pred_check_branch
        %217 = sbr.rel (%p215) target = $region28
      $region27: #{mlp_forward.1} parent=11 // pred_region
        _
      $region28: #{mlp_forward.1} parent=11 // pred_fallthru
        _
      // Predicated region
      $region29: #{mlp_forward.1} parent=11 // pred_check
        %p218 = pneg %p144
      $region30: #{mlp_forward.1} parent=11 // pred_check_branch
        %220 = sbr.rel (%p218) target = $region32
      $region31: #{mlp_forward.1} parent=11 // pred_region
        _
      $region32: #{mlp_forward.1} parent=11 // pred_fallthru
        _
      // Predicated region
      $region33: #{mlp_forward.1} parent=11 // pred_check
        %p221 = pneg %p165
      $region34: #{mlp_forward.1} parent=11 // pred_check_branch
        %223 = sbr.rel (%p221) target = $region36
      $region35: #{mlp_forward.1} parent=11 // pred_region
        _
      $region36: #{mlp_forward.1} parent=11 // pred_fallthru
        _
    $region12: #{mlp_forward.1} parent=5 // pred_fallthru
      _
    %p224 = scmp.lt.s32.totalorder %s13, 2
    // Predicated region
    $region37: #{mlp_forward.1} parent=5 // pred_check
      %p225 = pneg %p224
    $region38: #{mlp_forward.1} parent=5 // pred_check_branch
      %227 = sbr.rel (%p225) target = $region40
    $region39: #{mlp_forward.1} parent=5 // pred_region
      // Predicated region
      $region41: #{mlp_forward.1} parent=39 // pred_check
        %p228 = pneg %p33
      $region42: #{mlp_forward.1} parent=39 // pred_check_branch
        %230 = sbr.rel (%p228) target = $region44
      $region43: #{mlp_forward.1} parent=39 // pred_region
        %s231 = smul.u32 2, %s13
        %p232 = scmp.lt.s32.totalorder %s231, 3
        %s233 = scalar_select %p232, %s231, 3
        %s234 = smul.addr %s233, 4
        %s235 = scalar_lea.vmem %s0, %s234
        %s236 = smul.u32 2, %s13
      $region44: #{mlp_forward.1} parent=39 // pred_fallthru
        _
    $region40: #{mlp_forward.1} parent=5 // pred_fallthru
      _
    %p237 = scmp.le.s32.totalorder 1, %s13
    %p238 = scmp.lt.s32.totalorder %s13, 3
    %p239 = pnand %p237, %p238
    %p240 = pneg %p239
    // Predicated region
    $region45: #{mlp_forward.1} parent=5 // pred_check
      _
    $region46: #{mlp_forward.1} parent=5 // pred_check_branch
      %242 = sbr.rel (%p239) target = $region48
    $region47: #{mlp_forward.1} parent=5 // pred_region
      %s243 = ssub.s32 %s13, 1
      %s244 = smul.u32 2, %s18
      %p245 = scmp.lt.s32.totalorder %s244, 3
      %s246 = scalar_select %p245, %s244, 3
      %s247 = smul.addr %s246, 4
      %s248 = scalar_lea.vmem %s0, %s247
      %p249 = pneg %p39
      %p250 = pneg %p36
      %p251 = pneg %p60
      %p252 = pneg %p57
      %p253 = pneg %p81
      %p254 = pneg %p78
      %p255 = pneg %p102
      %p256 = pneg %p99
      %p257 = pneg %p123
      %p258 = pneg %p120
      %p259 = pneg %p144
      %p260 = pneg %p141
      %p261 = pneg %p165
      %p262 = pneg %p162
      %p263 = pneg %p191
      %p264 = pneg %p188
      %s265 = smul.u32 2, %s18
      %p266 = scmp.lt.s32.totalorder %s265, 3
      %s267 = scalar_select %p266, %s265, 3
      %s268 = smul.addr %s267, 8
      %s269 = scalar_lea.vmem %s7, %s268
      %s270 = smul.u32 2, %s18
      %p271 = scmp.lt.s32.totalorder %s270, 3
      %s272 = scalar_select %p271, %s270, 3
      %s273 = smul.addr %s272, 4
      %s274 = scalar_lea.vmem %s0, %s273
      %s275 = smul.u32 2, %s18
      %s276 = smul.u32 2, %s18
      %p277 = scmp.lt.s32.totalorder %s276, 3
      %s278 = scalar_select %p277, %s276, 3
      %s279 = smul.addr %s278, 8
      %s280 = scalar_lea.vmem %s7, %s279
      %s281 = smul.u32 2, %s18
      %v282 = vld [vmem:[%s274] sm:$0xf]
      %v283 = vld [vmem:[%s274 + $0x4] sm:$0xf]
      %v284 = vld [vmem:[%s1] sm:$0xf]
      %v285 = vld [vmem:[%s1 + $0x4] sm:$0xf]
      %v286 = vld [vmem:[%s1 + $0x8] sm:$0xf]
      %v287 = vld [vmem:[%s1 + $0xc] sm:$0xf]
      %v288 = vld [vmem:[%s1 + $0x10] sm:$0xf]
      %v289 = vld [vmem:[%s1 + $0x14] sm:$0xf]
      %v290 = vld [vmem:[%s1 + $0x18] sm:$0xf]
      %v291 = vld [vmem:[%s1 + $0x1c] sm:$0xf]
      %v292 = vld [vmem:[%s1 + $0x20] sm:$0xf]
      %v293 = vld [vmem:[%s1 + $0x24] sm:$0xf]
      %v294 = vld [vmem:[%s1 + $0x28] sm:$0xf]
      %v295 = vld [vmem:[%s1 + $0x2c] sm:$0xf]
      %v296 = vld [vmem:[%s1 + $0x30] sm:$0xf]
      %v297 = vld [vmem:[%s1 + $0x34] sm:$0xf]
      %v298 = vld [vmem:[%s1 + $0x38] sm:$0xf]
      %v299 = vld [vmem:[%s1 + $0x3c] sm:$0xf]
      %v300 = vld [vmem:[%s2] sm:$0x1]
      %v302 = vperm.slane %v300, 0
      %v306 = vunpack.c.l.b16 %v282
      %v307 = vunpack.c.l.b16 %v283
      %v308 = vpack.c.b16 %v307, %v306
      %v326 = vunpack.c.l.b16 %v284
      %v327 = vunpack.c.l.b16 %v285
      %v328 = vunpack.c.l.b16 %v286
      %v329 = vunpack.c.l.b16 %v287
      %v330 = vunpack.c.l.b16 %v288
      %v331 = vunpack.c.l.b16 %v289
      %v332 = vunpack.c.l.b16 %v290
      %v333 = vunpack.c.l.b16 %v291
      %v334 = vunpack.c.l.b16 %v292
      %v335 = vunpack.c.l.b16 %v293
      %v336 = vunpack.c.l.b16 %v294
      %v337 = vunpack.c.l.b16 %v295
      %v338 = vunpack.c.l.b16 %v296
      %v339 = vunpack.c.l.b16 %v297
      %v340 = vunpack.c.l.b16 %v298
      %v341 = vunpack.c.l.b16 %v299
      %v342 = vpack.c.b16 %v327, %v326
      %v343 = vpack.c.b16 %v329, %v328
      %v344 = vpack.c.b16 %v331, %v330
      %v345 = vpack.c.b16 %v333, %v332
      %v346 = vpack.c.b16 %v335, %v334
      %v347 = vpack.c.b16 %v337, %v336
      %v348 = vpack.c.b16 %v339, %v338
      %v349 = vpack.c.b16 %v341, %v340
      %358 = vmatpush.bf16.msra.mxu0 %v349
      %359 = vmatpush.bf16.msra.mxu0 %v348
      %360 = vmatpush.bf16.msra.mxu0 %v347
      %361 = vmatpush.bf16.msra.mxu0 %v346
      %362 = vmatpush.bf16.msra.mxu0 %v345
      %363 = vmatpush.bf16.msra.mxu0 %v344
      %364 = vmatpush.bf16.msra.mxu0 %v343
      %365 = vmatpush.bf16.msra.mxu0 %v342
      %366 = vmatmul.bf16.gmra.mxu0 %v308
      %v367 = vpop.f32.mrf.mxu0
      %v368 = vadd.f32 %v302, %v367
      %v369 = vpop.f32.mrf.mxu0
      %v370 = vadd.f32 %v302, %v369
      %371 = vdwg.mxu0
      %v372 = vpack.c.bf16 %v370, %v368
      %v373 = vld [vmem:[%s3] sm:$0xf]
      %v374 = vld [vmem:[%s3 + $0x4] sm:$0xf]
      %v375 = vld [vmem:[%s3 + $0x8] sm:$0xf]
      %v376 = vld [vmem:[%s3 + $0xc] sm:$0xf]
      %v377 = vld [vmem:[%s3 + $0x10] sm:$0xf]
      %v378 = vld [vmem:[%s3 + $0x14] sm:$0xf]
      %v379 = vld [vmem:[%s3 + $0x18] sm:$0xf]
      %v380 = vld [vmem:[%s3 + $0x1c] sm:$0xf]
      %v381 = vld [vmem:[%s3 + $0x20] sm:$0xf]
      %v382 = vld [vmem:[%s3 + $0x24] sm:$0xf]
      %v383 = vld [vmem:[%s3 + $0x28] sm:$0xf]
      %v384 = vld [vmem:[%s3 + $0x2c] sm:$0xf]
      %v385 = vld [vmem:[%s3 + $0x30] sm:$0xf]
      %v386 = vld [vmem:[%s3 + $0x34] sm:$0xf]
      %v387 = vld [vmem:[%s3 + $0x38] sm:$0xf]
      %v388 = vld [vmem:[%s3 + $0x3c] sm:$0xf]
      %v389 = vld [vmem:[%s4] sm:$0x1]
      %v391 = vperm.slane %v389, 0
      %v409 = vunpack.c.l.b16 %v373
      %v410 = vunpack.c.l.b16 %v374
      %v411 = vunpack.c.l.b16 %v375
      %v412 = vunpack.c.l.b16 %v376
      %v413 = vunpack.c.l.b16 %v377
      %v414 = vunpack.c.l.b16 %v378
      %v415 = vunpack.c.l.b16 %v379
      %v416 = vunpack.c.l.b16 %v380
      %v417 = vunpack.c.l.b16 %v381
      %v418 = vunpack.c.l.b16 %v382
      %v419 = vunpack.c.l.b16 %v383
      %v420 = vunpack.c.l.b16 %v384
      %v421 = vunpack.c.l.b16 %v385
      %v422 = vunpack.c.l.b16 %v386
      %v423 = vunpack.c.l.b16 %v387
      %v424 = vunpack.c.l.b16 %v388
      %v425 = vpack.c.b16 %v410, %v409
      %v426 = vpack.c.b16 %v412, %v411
      %v427 = vpack.c.b16 %v414, %v413
      %v428 = vpack.c.b16 %v416, %v415
      %v429 = vpack.c.b16 %v418, %v417
      %v430 = vpack.c.b16 %v420, %v419
      %v431 = vpack.c.b16 %v422, %v421
      %v432 = vpack.c.b16 %v424, %v423
      %441 = vmatpush.bf16.msra.mxu0 %v432
      %442 = vmatpush.bf16.msra.mxu0 %v431
      %443 = vmatpush.bf16.msra.mxu0 %v430
      %444 = vmatpush.bf16.msra.mxu0 %v429
      %445 = vmatpush.bf16.msra.mxu0 %v428
      %446 = vmatpush.bf16.msra.mxu0 %v427
      %447 = vmatpush.bf16.msra.mxu0 %v426
      %448 = vmatpush.bf16.msra.mxu0 %v425
      %449 = vmatmul.bf16.gmra.mxu0 %v372
      %v450 = vpop.f32.mrf.mxu0
      %v451 = vadd.f32 %v391, %v450
      %v452 = vpop.f32.mrf.mxu0
      %v453 = vadd.f32 %v391, %v452
      %454 = vdwg.mxu0
      %vm455 = vcmp.gt.f32.partialorder %v451, 20.0
      %vm456 = vcmp.gt.f32.partialorder %v453, 20.0
      %v457 = vmin.f32 %v451, 20.0
      %v458 = vmin.f32 %v453, 20.0
      %v459 = vmul.f32 %v457, 1.442695
      %v460 = vpow.pop %v459
      %v461 = vmul.f32 %v458, 1.442695
      %v462 = vpow.pop %v461
      %v463 = vadd.f32 %v460, 1.0
      %v464 = vlog2.pop %v463
      %v465 = vmul.f32 %v464, 0.6931472
      %v466 = vmul.f32 -0.5, %v460
      %v467 = vadd.f32 %v466, 1.0
      %v468 = vmul.f32 %v467, %v460
      %v469 = vand.u32 2147483647, %v460
      %vm470 = vcmp.lt.f32.partialorder %v469, 0.0004427343
      %v471 = vsel %vm470, %v468, %v465
      %v472 = vadd.f32 %v462, 1.0
      %v473 = vlog2.pop %v472
      %v474 = vmul.f32 %v473, 0.6931472
      %v475 = vmul.f32 -0.5, %v462
      %v476 = vadd.f32 %v475, 1.0
      %v477 = vmul.f32 %v476, %v462
      %v478 = vand.u32 2147483647, %v462
      %vm479 = vcmp.lt.f32.partialorder %v478, 0.0004427343
      %v480 = vsel %vm479, %v477, %v474
      %v481 = vsel %vm455, %v451, %v471
      %v482 = vsel %vm456, %v453, %v480
      %v483 = vtanh.pop %v481
      %v484 = vtanh.pop %v482
      %v485 = vmul.f32 %v451, %v483
      %v486 = vmul.f32 %v453, %v484
      %v487 = vpack.c.bf16 %v486, %v485
      %v488 = vld [vmem:[%s5] sm:$0xf]
      %v489 = vld [vmem:[%s5 + $0x4] sm:$0xf]
      %v490 = vld [vmem:[%s5 + $0x8] sm:$0xf]
      %v491 = vld [vmem:[%s5 + $0xc] sm:$0xf]
      %v492 = vld [vmem:[%s5 + $0x10] sm:$0xf]
      %v493 = vld [vmem:[%s5 + $0x14] sm:$0xf]
      %v494 = vld [vmem:[%s5 + $0x18] sm:$0xf]
      %v495 = vld [vmem:[%s5 + $0x1c] sm:$0xf]
      %v496 = vld [vmem:[%s5 + $0x20] sm:$0xf]
      %v497 = vld [vmem:[%s5 + $0x24] sm:$0xf]
      %v498 = vld [vmem:[%s5 + $0x28] sm:$0xf]
      %v499 = vld [vmem:[%s5 + $0x2c] sm:$0xf]
      %v500 = vld [vmem:[%s5 + $0x30] sm:$0xf]
      %v501 = vld [vmem:[%s5 + $0x34] sm:$0xf]
      %v502 = vld [vmem:[%s5 + $0x38] sm:$0xf]
      %v503 = vld [vmem:[%s5 + $0x3c] sm:$0xf]
      %v504 = vld [vmem:[%s6] sm:$0x1]
      %v506 = vperm.slane %v504, 0
      %v524 = vunpack.c.l.b16 %v488
      %v525 = vunpack.c.l.b16 %v489
      %v526 = vunpack.c.l.b16 %v490
      %v527 = vunpack.c.l.b16 %v491
      %v528 = vunpack.c.l.b16 %v492
      %v529 = vunpack.c.l.b16 %v493
      %v530 = vunpack.c.l.b16 %v494
      %v531 = vunpack.c.l.b16 %v495
      %v532 = vunpack.c.l.b16 %v496
      %v533 = vunpack.c.l.b16 %v497
      %v534 = vunpack.c.l.b16 %v498
      %v535 = vunpack.c.l.b16 %v499
      %v536 = vunpack.c.l.b16 %v500
      %v537 = vunpack.c.l.b16 %v501
      %v538 = vunpack.c.l.b16 %v502
      %v539 = vunpack.c.l.b16 %v503
      %v540 = vpack.c.b16 %v525, %v524
      %v541 = vpack.c.b16 %v527, %v526
      %v542 = vpack.c.b16 %v529, %v528
      %v543 = vpack.c.b16 %v531, %v530
      %v544 = vpack.c.b16 %v533, %v532
      %v545 = vpack.c.b16 %v535, %v534
      %v546 = vpack.c.b16 %v537, %v536
      %v547 = vpack.c.b16 %v539, %v538
      %556 = vmatpush.bf16.msra.mxu0 %v547
      %557 = vmatpush.bf16.msra.mxu0 %v546
      %558 = vmatpush.bf16.msra.mxu0 %v545
      %559 = vmatpush.bf16.msra.mxu0 %v544
      %560 = vmatpush.bf16.msra.mxu0 %v543
      %561 = vmatpush.bf16.msra.mxu0 %v542
      %562 = vmatpush.bf16.msra.mxu0 %v541
      %563 = vmatpush.bf16.msra.mxu0 %v540
      %564 = vmatmul.bf16.gmra.mxu0 %v487
      %v565 = vpop.f32.mrf.mxu0
      %v566 = vadd.f32 %v506, %v565
      %v567 = vpop.f32.mrf.mxu0
      %v568 = vadd.f32 %v506, %v567
      %569 = vdwg.mxu0
      %570 = vst [vmem:[%s280] sm:$0xff] %v566
      %571 = vst [vmem:[%s280 + $0x8] sm:$0xff] %v568
      %s572 = smul.u32 2, %s18
      %p573 = scmp.lt.s32.totalorder %s572, 3
      %s574 = scalar_select %p573, %s572, 3
      %s575 = smul.addr %s574, 8
      %s576 = scalar_lea.vmem %s7, %s575
      // Predicated region
      $region49: #{mlp_forward.1} parent=47 // pred_check
        %p577 = pneg %p188
      $region50: #{mlp_forward.1} parent=47 // pred_check_branch
        %579 = sbr.rel (%p577) target = $region52
      $region51: #{mlp_forward.1} parent=47 // pred_region
        %s580 = smul.u32 2, %s18
      $region52: #{mlp_forward.1} parent=47 // pred_fallthru
        _
    $region48: #{mlp_forward.1} parent=5 // pred_fallthru
      _
    %p581 = scmp.le.s32.totalorder 2, %s13
    // Predicated region
    $region53: #{mlp_forward.1} parent=5 // pred_check
      %p582 = pneg %p581
    $region54: #{mlp_forward.1} parent=5 // pred_check_branch
      %584 = sbr.rel (%p582) target = $region56
    $region55: #{mlp_forward.1} parent=5 // pred_region
      %s585 = ssub.s32 %s13, 2
      // Predicated region
      $region57: #{mlp_forward.1} parent=55 // pred_check
        %p586 = pneg %p194
      $region58: #{mlp_forward.1} parent=55 // pred_check_branch
        %588 = sbr.rel (%p586) target = $region60
      $region59: #{mlp_forward.1} parent=55 // pred_region
        %s589 = smul.u32 2, %s19
        %p590 = scmp.lt.s32.totalorder %s589, 3
        %s591 = scalar_select %p590, %s589, 3
        %s592 = smul.addr %s591, 8
        %s593 = scalar_lea.vmem %s7, %s592
      $region60: #{mlp_forward.1} parent=55 // pred_fallthru
        _
    $region56: #{mlp_forward.1} parent=5 // pred_fallthru
      _
  $region6: #{mlp_forward.1} parent=0 // loop_footer
    %s17 = sadd.s32 1, %s13
  $region7: #{mlp_forward.1} parent=0 // loop_footer_branch
    %12 = sbr.rel target = $region3
  $region8: #{mlp_forward.1} parent=0 // loop_exit
    _

</llo_original>
